<compile_context>
chip_gen: v7x
topology: tpu7x:2x2x1
jax: 0.10.0
libtpu: 0.0.40
codegen_flags: <defaults>
</compile_context>

<pallas_src>
import functools
import math

import jax
import jax.numpy as jnp
from jax.experimental import pallas as pl
from jax.experimental.pallas import tpu as pltpu


def _smoothed_linear_kernel(sigma, x_ref, e_ref, w_ref, b_ref, o_ref, acc_ref):
    """One (m, k) grid step: acc += bf16((x + sigma*eps)) @ bf16(W)."""
    k = pl.program_id(1)

    @pl.when(k == 0)
    def _init():
        acc_ref[...] = jnp.zeros_like(acc_ref)

    # Noise path in f32 (exact randn*sigma semantics, v5e-safe elementwise).
    x_noisy = x_ref[...] + e_ref[...] * sigma
    # MXU matmul with bf16 inputs, f32 accumulation.
    acc_ref[...] += jnp.dot(
        x_noisy.astype(w_ref.dtype), w_ref[...],
        preferred_element_type=jnp.float32)

    @pl.when(k == pl.num_programs(1) - 1)
    def _finalize():
        # Bias added once per output tile (epilogue only).
        o_ref[...] = (acc_ref[...] + b_ref[...]).astype(o_ref.dtype)


def _pick_m_tile(batch):
    for c in (256, 128, 64, 32, 16, 8):
        if batch % c == 0:
            return c
    return batch  # small batch: full extent (allowed by the (8,128) rule)


def _pick_k_tile(feat):
    # Prefer >= 2 reduction steps so the K pipeline / accumulator is exercised;
    # keep tiles <= 2048 f32 columns so double-buffered inputs fit v7x's 64 MiB.
    for c in (2048, 1024, 512, 256, 128):
        if feat % c == 0 and feat // c >= 2:
            return c
    return feat


def rand_smoothed_forward(x_nchw, w, b, key, sigma):
    """
    x_nchw : [B, C, H, W] float32   (PyTorch NCHW convention)
    w      : [C*H*W, num_classes] float32
    b      : [num_classes] float32
    key    : jax PRNG key for the Gaussian noise (randn_like equivalent)
    sigma  : python float, noise std-dev
    returns: [B, num_classes] float32 logits of the perturbed samples
    """
    B = int(x_nchw.shape[0])
    feat = int(math.prod(x_nchw.shape[1:]))
    num_classes = int(w.shape[1])

    LANES = 128
    n_pad = (-num_classes) % LANES
    n_padded = num_classes + n_pad

    # Glue reshapes / padding (layout plumbing, not compute).
    x_flat = x_nchw.reshape(B, feat).astype(jnp.float32)
    eps = jax.random.normal(key, (B, feat), dtype=jnp.float32)  # randn_like(x)
    w_p = jnp.pad(w.astype(jnp.float32), ((0, 0), (0, n_pad))).astype(jnp.bfloat16)
    b_p = jnp.pad(b.astype(jnp.float32), (0, n_pad)).reshape(1, n_padded)

    tm = _pick_m_tile(B)
    tk = _pick_k_tile(feat)
    grid = (B // tm, feat // tk)

    # Scoped-VMEM budget from the chosen tiles (double-buffered inputs/outputs).
    per_step_bytes = (
        2 * tm * tk * 4            # x tiles (f32)
        + 2 * tm * tk * 4          # eps tiles (f32)
        + 2 * tk * n_padded * 2    # W tiles (bf16)
        + 2 * 1 * n_padded * 4     # bias
        + 2 * tm * n_padded * 4    # output tiles
        + tm * n_padded * 4        # accumulator
    )
    vmem_limit = int(min(64 << 20, max(16 << 20, 4 * per_step_bytes)))

    kernel = functools.partial(_smoothed_linear_kernel, float(sigma))

    out_padded = pl.pallas_call(
        kernel,
        out_shape=jax.ShapeDtypeStruct((B, n_padded), jnp.float32),
        grid=grid,
        in_specs=[
            pl.BlockSpec((tm, tk), lambda i, k: (i, k)),         # x
            pl.BlockSpec((tm, tk), lambda i, k: (i, k)),         # eps
            pl.BlockSpec((tk, n_padded), lambda i, k: (k, 0)),   # W
            pl.BlockSpec((1, n_padded), lambda i, k: (0, 0)),    # bias
        ],
        out_specs=pl.BlockSpec((tm, n_padded), lambda i, k: (i, 0)),
        scratch_shapes=[pltpu.VMEM((tm, n_padded), jnp.float32)],
        compiler_params=pltpu.CompilerParams(
            dimension_semantics=("parallel", "arbitrary"),
            vmem_limit_bytes=vmem_limit,
        ),
    )(x_flat, eps, w_p, b_p)

    return out_padded[:, :num_classes]


if __name__ == "__main__":
    # Small deterministic example consistent with the module's forward:
    # x: [batch=2, channels=4, H=16, W=16], num classes = 10, sigma = 0.25
    B, C, H, W = 2, 4, 16, 16
    NUM_CLASSES = 10
    SIGMA = 0.25

    root = jax.random.PRNGKey(0)
    kx, kw, kb, knoise = jax.random.split(root, 4)

    x = jax.random.normal(kx, (B, C, H, W), dtype=jnp.float32)
    # Deterministic synthetic "base classifier" parameters.
    w = jax.random.normal(kw, (C * H * W, NUM_CLASSES), dtype=jnp.float32) * 0.02
    b = jax.random.normal(kb, (NUM_CLASSES,), dtype=jnp.float32) * 0.1

    logits = rand_smoothed_forward(x, w, b, knoise, SIGMA)
    logits = jax.block_until_ready(logits)

    # Pure-JAX reference with the identical epsilon (same key, same shape).
    eps_ref = jax.random.normal(knoise, (B, C * H * W), dtype=jnp.float32)
    ref = (x.reshape(B, -1) + SIGMA * eps_ref) @ w + b

    assert logits.shape == (B, NUM_CLASSES)
    assert jnp.all(jnp.isfinite(logits))
    assert jnp.allclose(logits, ref, rtol=5e-2, atol=5e-2), float(
        jnp.max(jnp.abs(logits - ref)))
    print("KERNEL_OK")
</pallas_src>

<mosaic_0001>
module attributes {stable_mosaic.version = 11 : i64} {
  func.func @_smoothed_linear_kernel(%arg0: i32, %arg1: i32, %arg2: memref<2x512xf32, #tpu.memory_space<vmem>>, %arg3: memref<2x512xf32, #tpu.memory_space<vmem>>, %arg4: memref<512x128xbf16, #tpu.memory_space<vmem>>, %arg5: memref<1x128xf32, #tpu.memory_space<vmem>>, %arg6: memref<2x128xf32, #tpu.memory_space<vmem>>, %arg7: memref<2x128xf32, #tpu.memory_space<vmem>>) attributes {dimension_semantics = [#tpu.dimension_semantics<parallel>, #tpu.dimension_semantics<arbitrary>], iteration_bounds = array<i64: 1, 2>, scalar_prefetch = 0 : i64, scratch_operands = 1 : i64, tpu.core_type = #tpu.core_type<tc>, window_params = [{transform_indices = @transform_0, window_bounds = array<i64: 2, 512>}, {transform_indices = @transform_1, window_bounds = array<i64: 2, 512>}, {transform_indices = @transform_2, window_bounds = array<i64: 512, 128>}, {pipeline_mode = #tpu.pipeline_mode<synchronous>, transform_indices = @transform_3, window_bounds = array<i64: 1, 128>}, {transform_indices = @transform_4, window_bounds = array<i64: 2, 128>}]} {
    %c0_i32 = arith.constant 0 : i32
    %0 = arith.cmpi eq, %arg1, %c0_i32 : i32
    %1 = arith.extui %0 : i1 to i32
    %c0_i32_0 = arith.constant 0 : i32
    %2 = arith.cmpi ne, %1, %c0_i32_0 : i32
    scf.if %2 {
      %cst_12 = arith.constant 0.000000e+00 : f32
      %17 = vector.broadcast %cst_12 : f32 to vector<2x128xf32>
      %c0_13 = arith.constant 0 : index
      %c0_14 = arith.constant 0 : index
      %18 = vector.load %arg7[%c0_13, %c0_14] : memref<2x128xf32, #tpu.memory_space<vmem>>, vector<2x128xf32>
      tpu.vector_store %arg7[%c0_13, %c0_14], %17 {strides = array<i32>} : memref<2x128xf32, #tpu.memory_space<vmem>>, vector<2x128xf32>,
    } else {
    }
    %c0 = arith.constant 0 : index
    %c0_1 = arith.constant 0 : index
    %3 = vector.load %arg2[%c0, %c0_1] : memref<2x512xf32, #tpu.memory_space<vmem>>, vector<2x512xf32>
    %c0_2 = arith.constant 0 : index
    %c0_3 = arith.constant 0 : index
    %4 = vector.load %arg3[%c0_2, %c0_3] : memref<2x512xf32, #tpu.memory_space<vmem>>, vector<2x512xf32>
    %cst = arith.constant 2.500000e-01 : f32
    %5 = vector.broadcast %cst : f32 to vector<2x512xf32>
    %6 = arith.mulf %4, %5 : vector<2x512xf32>
    %7 = arith.addf %3, %6 : vector<2x512xf32>
    %c0_4 = arith.constant 0 : index
    %c0_5 = arith.constant 0 : index
    %8 = vector.load %arg7[%c0_4, %c0_5] : memref<2x128xf32, #tpu.memory_space<vmem>>, vector<2x128xf32>
    %9 = arith.truncf %7 : vector<2x512xf32> to vector<2x512xbf16>
    %c0_6 = arith.constant 0 : index
    %c0_7 = arith.constant 0 : index
    %10 = vector.load %arg4[%c0_6, %c0_7] : memref<512x128xbf16, #tpu.memory_space<vmem>>, vector<512x128xbf16>
    %cst_8 = arith.constant dense<0.000000e+00> : vector<2x128xf32>
    %11 = tpu.matmul %9, %10, %cst_8 {dimension_numbers = #tpu.dot_dimension_numbers<[1], [0], [0], [1], [0, 0, 1, 1], [], []>} : vector<2x512xbf16>, vector<512x128xbf16>, vector<2x128xf32> -> vector<2x128xf32>
    %12 = arith.addf %8, %11 : vector<2x128xf32>
    %c0_9 = arith.constant 0 : index
    %c0_10 = arith.constant 0 : index
    %13 = vector.load %arg7[%c0_9, %c0_10] : memref<2x128xf32, #tpu.memory_space<vmem>>, vector<2x128xf32>
    tpu.vector_store %arg7[%c0_9, %c0_10], %12 {strides = array<i32>} : memref<2x128xf32, #tpu.memory_space<vmem>>, vector<2x128xf32>,
    %c1_i32 = arith.constant 1 : i32
    %14 = arith.cmpi eq, %arg1, %c1_i32 : i32
    %15 = arith.extui %14 : i1 to i32
    %c0_i32_11 = arith.constant 0 : i32
    %16 = arith.cmpi ne, %15, %c0_i32_11 : i32
    scf.if %16 {
      %c0_12 = arith.constant 0 : index
      %c0_13 = arith.constant 0 : index
      %17 = vector.load %arg7[%c0_12, %c0_13] : memref<2x128xf32, #tpu.memory_space<vmem>>, vector<2x128xf32>
      %c0_14 = arith.constant 0 : index
      %c0_15 = arith.constant 0 : index
      %18 = vector.load %arg5[%c0_14, %c0_15] : memref<1x128xf32, #tpu.memory_space<vmem>>, vector<1x128xf32>
      %19 = vector.broadcast %18 : vector<1x128xf32> to vector<2x128xf32>
      %20 = arith.addf %17, %19 : vector<2x128xf32>
      %c0_16 = arith.constant 0 : index
      %c0_17 = arith.constant 0 : index
      %21 = vector.load %arg6[%c0_16, %c0_17] : memref<2x128xf32, #tpu.memory_space<vmem>>, vector<2x128xf32>
      tpu.vector_store %arg6[%c0_16, %c0_17], %20 {strides = array<i32>} : memref<2x128xf32, #tpu.memory_space<vmem>>, vector<2x128xf32>,
    } else {
    }
    return
  }
  func.func @transform_0(%arg0: i32, %arg1: i32) -> (i32, i32) {
    %c0_i32 = arith.constant 0 : i32
    return %arg0, %arg1 : i32, i32
  }
  func.func @transform_1(%arg0: i32, %arg1: i32) -> (i32, i32) {
    %c0_i32 = arith.constant 0 : i32
    return %arg0, %arg1 : i32, i32
  }
  func.func @transform_2(%arg0: i32, %arg1: i32) -> (i32, i32) {
    %c0_i32 = arith.constant 0 : i32
    %c0_i32_0 = arith.constant 0 : i32
    return %arg1, %c0_i32 : i32, i32
  }
  func.func @transform_3(%arg0: i32, %arg1: i32) -> (i32, i32) {
    %c0_i32 = arith.constant 0 : i32
    %c0_i32_0 = arith.constant 0 : i32
    %c0_i32_1 = arith.constant 0 : i32
    return %c0_i32, %c0_i32_0 : i32, i32
  }
  func.func @transform_4(%arg0: i32, %arg1: i32) -> (i32, i32) {
    %c0_i32 = arith.constant 0 : i32
    %c0_i32_0 = arith.constant 0 : i32
    return %arg0, %c0_i32 : i32, i32
  }
}

</mosaic_0001>

<llo_original>
// kernel: tpu_custom_call.1
$region0: #{tpu_custom_call.1}
  #allocation0 [shape = 'u32[]', space=smem, size = 0x4, offset = 0x4, fixed_abs, tag = 'smem constant byte address 0x4 - core index']
  #allocation1 [shape = 'u32[144,128]{1,0:T(1,128)}', space=vmem, size = 0x12000, scoped, tag = 'internal scratch']
  #allocation2 [shape = 'f32[2,128]{1,0:T(2,128)}', space=vmem, size = 0x400, scoped, tag = 'scratch operand']
  %s0 = inlined_call_operand.hbm [shape: f32[2,1024], index: 0, kind: input, shape index: {}]
  %s1 = inlined_call_operand.hbm [shape: f32[2,1024], index: 1, kind: input, shape index: {}]
  %s2 = inlined_call_operand.hbm [shape: bf16[1024,128], index: 2, kind: input, shape index: {}]
  %s3 = inlined_call_operand.vmem [shape: f32[1,128], index: 3, kind: input, shape index: {}]
  %s4 = inlined_call_operand.hbm [shape: f32[2,128], index: 4, kind: output, shape index: {}]
  %s5 = sld [smem:[#allocation0]]
  $region69: #{tpu_custom_call.1} parent=0
    _
  %s7 = ssub.s32 1, %s5
  %s8 = scalar_select 0, %s7, %s5
  $region1: #{tpu_custom_call.1} parent=0
    #allocation3 [shape = 'u8[8192]{0}', space=vmem, size = 0x2000, scoped, tag = 'input window, operand 0']
    #allocation4 [shape = 's32[2]{0}', space=sflag, size = 0x8, scoped, tag = 'scoped memory for tpu_custom_call.1']
    #allocation5 [shape = 's32[2]{0}', space=sflag, size = 0x8, scoped, tag = 'scoped memory for tpu_custom_call.1']
    #allocation6 [shape = 'u8[8192]{0}', space=vmem, size = 0x2000, scoped, tag = 'input window, operand 1']
    #allocation7 [shape = 's32[2]{0}', space=sflag, size = 0x8, scoped, tag = 'scoped memory for tpu_custom_call.1']
    #allocation8 [shape = 'u8[262144]{0}', space=vmem, size = 0x40000, scoped, tag = 'input window, operand 2']
    #allocation9 [shape = 'u8[1024]{0}', space=vmem, size = 0x400, scoped, tag = 'output window, operand 0, single buffered']
    %9 = vsyncpa [#allocation4], 0
    %s10 = scalar_lea.sflag [#allocation4], 1
    %11 = vsyncpa %s10, 0
    %12 = vsyncpa [#allocation7], 0
    %s13 = scalar_lea.sflag [#allocation7], 1
    %14 = vsyncpa %s13, 0
    %15 = vsyncpa [#allocation5], 0
    loop: start=0, step=1, limit=4
    $region2: #{tpu_custom_call.1} parent=1 // loop_pre_header
      _
    $region3: #{tpu_custom_call.1} parent=1 // loop_header
      %s17 = sphi 0, %s21
      %p18 = scmp.ge.s32.totalorder %s17, 4
      %s24 = sphi 0, %s36
      %s25 = sphi 0, %s32
      %s26 = sphi 0, %s24
      %s27 = sphi 0, %s25
      %s28 = sphi 0, %s26
      %s29 = sphi 0, %s27
      %s41 = sphi 0, %s43
      %s44 = sphi 0, %s41
      %s45 = sphi 0, %s44
      %s61 = sphi 0, %s45
      %s69 = sphi 0, %s71
      %s72 = sphi 0, %s69
      %s73 = sphi 0, %s72
      %s89 = sphi 0, %s73
      %s95 = sphi 0, %s97
      %s98 = sphi 0, %s95
      %s99 = sphi 0, %s98
      %s115 = sphi 0, %s99
      %s119 = sphi 0, %s119
      %s121 = sphi 0, %s119
      %s122 = sphi 0, %s121
      %s136 = sphi 0, %s122
      %s142 = sphi 0, %s144
      %s145 = sphi 0, %s142
      %s146 = sphi 0, %s145
      %s162 = sphi 0, %s146
    $region4: #{tpu_custom_call.1} parent=1 // loop_header_branch
      %20 = sbr.rel (%p18) target = $region8
    $region5: #{tpu_custom_call.1} parent=1 // loop_body
      %s22 = ssub.s32 %s17, 1
      %s23 = ssub.s32 %s17, 2
      %s30 = sadd.s32 1, %s25
      %p31 = scmp.ge.s32.totalorder %s30, 2
      %s32 = scalar_select %p31, 0, %s30
      %s33 = sadd.s32 1, %s24
      %s34 = scalar_select %p31, %s33, %s24
      %p35 = scmp.ge.s32.totalorder %s34, 1
      %s36 = scalar_select %p35, 0, %s34
      %s37 = ssub.s32 %s24, %s36
      %s38 = ssub.s32 %s25, %s32
      %s39 = sor.u32 %s37, %s38
      %p40 = scmp.eq.s32.totalorder %s39, 0
      %s42 = sadd.s32 %s41, 1
      %s43 = scalar_select %p40, %s41, %s42
      %p46 = pneg %p40
      %p47 = scmp.eq.s32.totalorder %s17, 1
      %p48 = por %p46, %p47
      %p49 = scmp.ne.s32.totalorder %s41, %s44
      %p50 = scmp.eq.s32.totalorder %s17, 0
      %p51 = por %p49, %p50
      %p52 = scmp.ne.s32.totalorder %s41, %s44
      %p53 = scmp.eq.s32.totalorder %s22, 1
      %p54 = por %p52, %p53
      %p55 = scmp.ne.s32.totalorder %s44, %s45
      %p56 = scmp.eq.s32.totalorder %s22, 0
      %p57 = por %p55, %p56
      %p58 = scmp.ne.s32.totalorder %s44, %s45
      %p59 = scmp.eq.s32.totalorder %s23, 1
      %p60 = por %p58, %p59
      %p62 = scmp.ne.s32.totalorder %s45, %s61
      %p63 = scmp.eq.s32.totalorder %s23, 0
      %p64 = por %p62, %p63
      %s65 = ssub.s32 %s24, %s36
      %s66 = ssub.s32 %s25, %s32
      %s67 = sor.u32 %s65, %s66
      %p68 = scmp.eq.s32.totalorder %s67, 0
      %s70 = sadd.s32 %s69, 1
      %s71 = scalar_select %p68, %s69, %s70
      %p74 = pneg %p68
      %p75 = scmp.eq.s32.totalorder %s17, 1
      %p76 = por %p74, %p75
      %p77 = scmp.ne.s32.totalorder %s69, %s72
      %p78 = scmp.eq.s32.totalorder %s17, 0
      %p79 = por %p77, %p78
      %p80 = scmp.ne.s32.totalorder %s69, %s72
      %p81 = scmp.eq.s32.totalorder %s22, 1
      %p82 = por %p80, %p81
      %p83 = scmp.ne.s32.totalorder %s72, %s73
      %p84 = scmp.eq.s32.totalorder %s22, 0
      %p85 = por %p83, %p84
      %p86 = scmp.ne.s32.totalorder %s72, %s73
      %p87 = scmp.eq.s32.totalorder %s23, 1
      %p88 = por %p86, %p87
      %p90 = scmp.ne.s32.totalorder %s73, %s89
      %p91 = scmp.eq.s32.totalorder %s23, 0
      %p92 = por %p90, %p91
      %s93 = ssub.s32 %s25, %s32
      %p94 = scmp.eq.s32.totalorder %s93, 0
      %s96 = sadd.s32 %s95, 1
      %s97 = scalar_select %p94, %s95, %s96
      %p100 = pneg %p94
      %p101 = scmp.eq.s32.totalorder %s17, 1
      %p102 = por %p100, %p101
      %p103 = scmp.ne.s32.totalorder %s95, %s98
      %p104 = scmp.eq.s32.totalorder %s17, 0
      %p105 = por %p103, %p104
      %p106 = scmp.ne.s32.totalorder %s95, %s98
      %p107 = scmp.eq.s32.totalorder %s22, 1
      %p108 = por %p106, %p107
      %p109 = scmp.ne.s32.totalorder %s98, %s99
      %p110 = scmp.eq.s32.totalorder %s22, 0
      %p111 = por %p109, %p110
      %p112 = scmp.ne.s32.totalorder %s98, %s99
      %p113 = scmp.eq.s32.totalorder %s23, 1
      %p114 = por %p112, %p113
      %p116 = scmp.ne.s32.totalorder %s99, %s115
      %p117 = scmp.eq.s32.totalorder %s23, 0
      %p118 = por %p116, %p117
      %s120 = sadd.s32 %s119, 1
      %p123 = scmp.eq.s32.totalorder %s17, 1
      %p124 = scmp.ne.s32.totalorder %s119, %s121
      %p125 = scmp.eq.s32.totalorder %s17, 0
      %p126 = por %p124, %p125
      %p127 = scmp.ne.s32.totalorder %s119, %s121
      %p128 = scmp.eq.s32.totalorder %s22, 1
      %p129 = por %p127, %p128
      %p130 = scmp.ne.s32.totalorder %s121, %s122
      %p131 = scmp.eq.s32.totalorder %s22, 0
      %p132 = por %p130, %p131
      %p133 = scmp.ne.s32.totalorder %s121, %s122
      %p134 = scmp.eq.s32.totalorder %s23, 1
      %p135 = por %p133, %p134
      %p137 = scmp.ne.s32.totalorder %s122, %s136
      %p138 = scmp.eq.s32.totalorder %s23, 0
      %p139 = por %p137, %p138
      %s140 = ssub.s32 %s24, %s36
      %p141 = scmp.eq.s32.totalorder %s140, 0
      %s143 = sadd.s32 %s142, 1
      %s144 = scalar_select %p141, %s142, %s143
      %p147 = pneg %p141
      %p148 = scmp.eq.s32.totalorder %s17, 1
      %p149 = por %p147, %p148
      %p150 = scmp.ne.s32.totalorder %s142, %s145
      %p151 = scmp.eq.s32.totalorder %s17, 0
      %p152 = por %p150, %p151
      %p153 = scmp.ne.s32.totalorder %s142, %s145
      %p154 = scmp.eq.s32.totalorder %s22, 1
      %p155 = por %p153, %p154
      %p156 = scmp.ne.s32.totalorder %s145, %s146
      %p157 = scmp.eq.s32.totalorder %s22, 0
      %p158 = por %p156, %p157
      %p159 = scmp.ne.s32.totalorder %s145, %s146
      %p160 = scmp.eq.s32.totalorder %s23, 1
      %p161 = por %p159, %p160
      %p163 = scmp.ne.s32.totalorder %s146, %s162
      %p164 = scmp.eq.s32.totalorder %s23, 0
      %p165 = por %p163, %p164
      %p166 = scmp.le.s32.totalorder 1, %s17
      %p167 = scmp.lt.s32.totalorder %s17, 3
      %p168 = pnand %p166, %p167
      %p169 = pneg %p168
      // Predicated region
      $region9: #{tpu_custom_call.1} parent=5 // pred_check
        _
      $region10: #{tpu_custom_call.1} parent=5 // pred_check_branch
        %171 = sbr.rel (%p168) target = $region12
      $region11: #{tpu_custom_call.1} parent=5 // pred_region
        %s172 = ssub.s32 %s17, 1
        // Predicated region
        $region13: #{tpu_custom_call.1} parent=11 // pred_check
          %p173 = pneg %p132
        $region14: #{tpu_custom_call.1} parent=11 // pred_check_branch
          %175 = sbr.rel (%p173) target = $region16
        $region15: #{tpu_custom_call.1} parent=11 // pred_region
          _
        $region16: #{tpu_custom_call.1} parent=11 // pred_fallthru
          _
      $region12: #{tpu_custom_call.1} parent=5 // pred_fallthru
        _
      %p176 = scmp.lt.s32.totalorder %s17, 2
      // Predicated region
      $region17: #{tpu_custom_call.1} parent=5 // pred_check
        %p177 = pneg %p176
      $region18: #{tpu_custom_call.1} parent=5 // pred_check_branch
        %179 = sbr.rel (%p177) target = $region20
      $region19: #{tpu_custom_call.1} parent=5 // pred_region
        // Predicated region
        $region21: #{tpu_custom_call.1} parent=19 // pred_check
          %p180 = pneg %p51
        $region22: #{tpu_custom_call.1} parent=19 // pred_check_branch
          %182 = sbr.rel (%p180) target = $region24
        $region23: #{tpu_custom_call.1} parent=19 // pred_region
          %s183 = sand.u32 %s41, 1
          %s184 = scalar_lea.sflag [#allocation4], %s183
          %s185 = sand.u32 %s41, 1
          %s186 = smul.addr %s185, 8
          %s187 = scalar_lea.vmem [#allocation3], %s186
          %s188 = smul.u32 4, %s25
          %s190 = ssub.s32 128, 128
          %191 = vsyncadd %s184, %s190
          %s192 = smul.addr %s24, 8
          %s193 = sadd.s32 %s188, %s192
          %s194 = smul.addr %s193, 32
          %s195 = scalar_lea.hbm %s0, %s194
          %s197 = sshll.u32 %s187, 4
          %s198 = int_to_ptr.vmem [resolvable:$true] %s197
          %200 = dma.hbm_to_vmem [thread:$0]  %s195, 128, %s198, %s184
        $region24: #{tpu_custom_call.1} parent=19 // pred_fallthru
          _
        // Predicated region
        $region25: #{tpu_custom_call.1} parent=19 // pred_check
          %p201 = pneg %p79
        $region26: #{tpu_custom_call.1} parent=19 // pred_check_branch
          %203 = sbr.rel (%p201) target = $region28
        $region27: #{tpu_custom_call.1} parent=19 // pred_region
          %s204 = sand.u32 %s17, 1
          %s205 = scalar_lea.sflag [#allocation7], %s204
          %s206 = sand.u32 %s69, 1
          %s207 = smul.addr %s206, 8
          %s208 = scalar_lea.vmem [#allocation6], %s207
          %s209 = smul.u32 4, %s25
          %s211 = ssub.s32 128, 128
          %212 = vsyncadd %s205, %s211
          %s213 = smul.addr %s24, 8
          %s214 = sadd.s32 %s209, %s213
          %s215 = smul.addr %s214, 32
          %s216 = scalar_lea.hbm %s1, %s215
          %s218 = sshll.u32 %s208, 4
          %s219 = int_to_ptr.vmem [resolvable:$true] %s218
          %221 = dma.hbm_to_vmem [thread:$0]  %s216, 128, %s219, %s205
        $region28: #{tpu_custom_call.1} parent=19 // pred_fallthru
          _
        // Predicated region
        $region29: #{tpu_custom_call.1} parent=19 // pred_check
          %p222 = pneg %p105
        $region30: #{tpu_custom_call.1} parent=19 // pred_check_branch
          %224 = sbr.rel (%p222) target = $region32
        $region31: #{tpu_custom_call.1} parent=19 // pred_region
          %s225 = sand.u32 %s17, 1
          %s226 = scalar_lea.sflag [#allocation7], %s225
          %s227 = sand.u32 %s95, 1
          %s228 = smul.addr %s227, 256
          %s229 = scalar_lea.vmem [#allocation8], %s228
          %s230 = smul.u32 64, %s25
          %s232 = ssub.s32 4096, 4096
          %233 = vsyncadd %s226, %s232
          %s234 = smul.addr %s230, 64
          %s235 = scalar_lea.hbm %s2, %s234
          %s236 = sshll.u32 %s229, 4
          %s237 = int_to_ptr.vmem [resolvable:$true] %s236
          %242 = dma.hbm_to_vmem [thread:$0]  %s235, 4096, %s237, %s226, 64, 64, 4
        $region32: #{tpu_custom_call.1} parent=19 // pred_fallthru
          _
      $region20: #{tpu_custom_call.1} parent=5 // pred_fallthru
        _
      %p243 = scmp.le.s32.totalorder 1, %s17
      %p244 = scmp.lt.s32.totalorder %s17, 3
      %p245 = pnand %p243, %p244
      %p246 = pneg %p245
      // Predicated region
      $region33: #{tpu_custom_call.1} parent=5 // pred_check
        _
      $region34: #{tpu_custom_call.1} parent=5 // pred_check_branch
        %248 = sbr.rel (%p245) target = $region36
      $region35: #{tpu_custom_call.1} parent=5 // pred_region
        %s249 = ssub.s32 %s17, 1
        %s250 = sand.u32 %s44, 1
        %s251 = scalar_lea.sflag [#allocation4], %s250
        %s252 = sand.u32 %s44, 1
        %s253 = smul.addr %s252, 8
        %s254 = scalar_lea.vmem [#allocation3], %s253
        // Predicated region
        $region37: #{tpu_custom_call.1} parent=35 // pred_check
          %p255 = pneg %p57
        $region38: #{tpu_custom_call.1} parent=35 // pred_check_branch
          %257 = sbr.rel (%p255) target = $region40
        $region39: #{tpu_custom_call.1} parent=35 // pred_region
          %258 = dma.done %s251, 128
        $region40: #{tpu_custom_call.1} parent=35 // pred_fallthru
          _
        %s259 = sand.u32 %s22, 1
        %s260 = scalar_lea.sflag [#allocation7], %s259
        %s261 = sand.u32 %s72, 1
        %s262 = smul.addr %s261, 8
        %s263 = scalar_lea.vmem [#allocation6], %s262
        // Predicated region
        $region41: #{tpu_custom_call.1} parent=35 // pred_check
          %p264 = pneg %p85
        $region42: #{tpu_custom_call.1} parent=35 // pred_check_branch
          %266 = sbr.rel (%p264) target = $region44
        $region43: #{tpu_custom_call.1} parent=35 // pred_region
          %267 = dma.done %s260, 128
        $region44: #{tpu_custom_call.1} parent=35 // pred_fallthru
          _
        %s268 = sand.u32 %s22, 1
        %s269 = scalar_lea.sflag [#allocation7], %s268
        %s270 = sand.u32 %s98, 1
        %s271 = smul.addr %s270, 256
        %s272 = scalar_lea.vmem [#allocation8], %s271
        // Predicated region
        $region45: #{tpu_custom_call.1} parent=35 // pred_check
          %p273 = pneg %p111
        $region46: #{tpu_custom_call.1} parent=35 // pred_check_branch
          %275 = sbr.rel (%p273) target = $region48
        $region47: #{tpu_custom_call.1} parent=35 // pred_region
          %276 = dma.done %s269, 4096
        $region48: #{tpu_custom_call.1} parent=35 // pred_fallthru
          _
        %s277 = sand.u32 %s44, 1
        %s278 = scalar_lea.sflag [#allocation4], %s277
        %s279 = sand.u32 %s44, 1
        %s280 = smul.addr %s279, 8
        %s281 = scalar_lea.vmem [#allocation3], %s280
        %p282 = pneg %p57
        %p283 = pneg %p54
        %s284 = sand.u32 %s22, 1
        %s285 = scalar_lea.sflag [#allocation7], %s284
        %s286 = sand.u32 %s72, 1
        %s287 = smul.addr %s286, 8
        %s288 = scalar_lea.vmem [#allocation6], %s287
        %p289 = pneg %p85
        %p290 = pneg %p82
        %s291 = sand.u32 %s22, 1
        %s292 = scalar_lea.sflag [#allocation7], %s291
        %s293 = sand.u32 %s98, 1
        %s294 = smul.addr %s293, 256
        %s295 = scalar_lea.vmem [#allocation8], %s294
        %p296 = pneg %p111
        %p297 = pneg %p108
        %p298 = pneg %p132
        %p299 = pneg %p129
        %p300 = pneg %p158
        %p301 = pneg %p155
        %s302 = smul.u32 4, %s27
        %s303 = smul.u32 4, %s27
        %s304 = smul.u32 64, %s27
        %p306 = scmp.eq.s32.totalorder %s27, 0
        // Predicated region
        $region49: #{tpu_custom_call.1} parent=35 // pred_check
          %p307 = pneg %p306
        $region50: #{tpu_custom_call.1} parent=35 // pred_check_branch
          %309 = sbr.rel (%p307) target = $region52
        $region51: #{tpu_custom_call.1} parent=35 // pred_region
          %310 = vst [vmem:[#allocation2] sm:$0x3] 0.0
        $region52: #{tpu_custom_call.1} parent=35 // pred_fallthru
          _
        %v311 = vld [vmem:[%s254] sm:$0xff]
        %v312 = vld [vmem:[%s263] sm:$0xff]
        %v313 = vmul.f32 %v312, 0.25
        %v314 = vadd.f32 %v311, %v313
        %v315 = vld [vmem:[#allocation2] sm:$0x3]
        %v317 = vcombine.high %v314, %v314
        %v319 = vunpack.c.l.s4 1983009808
        %v320 = vunpack.c.0.s8 %v319
        %v321 = vlaneseq
        %v322 = vshrl.u32 %v321, 7
        %v323 = vsub.s32 %v320, %v322
        %v324 = vrot.slane %v314, %v323
        %v326 = vunpack.c.l.s4 1983009808
        %v327 = vunpack.c.0.s8 %v326
        %v328 = vlaneseq
        %v329 = vshrl.u32 %v328, 7
        %v330 = vsub.s32 %v327, %v329
        %v331 = vrot.slane %v317, %v330
        %v332 = vcombine.high %v324, %v324
        %v333 = vcombine.high %v331, %v331
        %v338 = vpack.c.bf16 %v324, %v324
        %v339 = vpack.c.bf16 %v332, %v332
        %v340 = vpack.c.bf16 %v331, %v331
        %v341 = vpack.c.bf16 %v333, %v333
        %v342 = vld [vmem:[%s272] sm:$0xf]
        %v343 = vld [vmem:[%s272 + $0x4] sm:$0xf]
        %v344 = vld [vmem:[%s272 + $0x8] sm:$0xf]
        %v345 = vld [vmem:[%s272 + $0xc] sm:$0xf]
        %v346 = vld [vmem:[%s272 + $0x10] sm:$0xf]
        %v347 = vld [vmem:[%s272 + $0x14] sm:$0xf]
        %v348 = vld [vmem:[%s272 + $0x18] sm:$0xf]
        %v349 = vld [vmem:[%s272 + $0x1c] sm:$0xf]
        %v350 = vld [vmem:[%s272 + $0x20] sm:$0xf]
        %v351 = vld [vmem:[%s272 + $0x24] sm:$0xf]
        %v352 = vld [vmem:[%s272 + $0x28] sm:$0xf]
        %v353 = vld [vmem:[%s272 + $0x2c] sm:$0xf]
        %v354 = vld [vmem:[%s272 + $0x30] sm:$0xf]
        %v355 = vld [vmem:[%s272 + $0x34] sm:$0xf]
        %v356 = vld [vmem:[%s272 + $0x38] sm:$0xf]
        %v357 = vld [vmem:[%s272 + $0x3c] sm:$0xf]
        %v358 = vld [vmem:[%s272 + $0x40] sm:$0xf]
        %v359 = vld [vmem:[%s272 + $0x44] sm:$0xf]
        %v360 = vld [vmem:[%s272 + $0x48] sm:$0xf]
        %v361 = vld [vmem:[%s272 + $0x4c] sm:$0xf]
        %v362 = vld [vmem:[%s272 + $0x50] sm:$0xf]
        %v363 = vld [vmem:[%s272 + $0x54] sm:$0xf]
        %v364 = vld [vmem:[%s272 + $0x58] sm:$0xf]
        %v365 = vld [vmem:[%s272 + $0x5c] sm:$0xf]
        %v366 = vld [vmem:[%s272 + $0x60] sm:$0xf]
        %v367 = vld [vmem:[%s272 + $0x64] sm:$0xf]
        %v368 = vld [vmem:[%s272 + $0x68] sm:$0xf]
        %v369 = vld [vmem:[%s272 + $0x6c] sm:$0xf]
        %v370 = vld [vmem:[%s272 + $0x70] sm:$0xf]
        %v371 = vld [vmem:[%s272 + $0x74] sm:$0xf]
        %v372 = vld [vmem:[%s272 + $0x78] sm:$0xf]
        %v373 = vld [vmem:[%s272 + $0x7c] sm:$0xf]
        %v374 = vld [vmem:[%s272 + $0x80] sm:$0xf]
        %v375 = vld [vmem:[%s272 + $0x84] sm:$0xf]
        %v376 = vld [vmem:[%s272 + $0x88] sm:$0xf]
        %v377 = vld [vmem:[%s272 + $0x8c] sm:$0xf]
        %v378 = vld [vmem:[%s272 + $0x90] sm:$0xf]
        %v379 = vld [vmem:[%s272 + $0x94] sm:$0xf]
        %v380 = vld [vmem:[%s272 + $0x98] sm:$0xf]
        %v381 = vld [vmem:[%s272 + $0x9c] sm:$0xf]
        %v382 = vld [vmem:[%s272 + $0xa0] sm:$0xf]
        %v383 = vld [vmem:[%s272 + $0xa4] sm:$0xf]
        %v384 = vld [vmem:[%s272 + $0xa8] sm:$0xf]
        %v385 = vld [vmem:[%s272 + $0xac] sm:$0xf]
        %v386 = vld [vmem:[%s272 + $0xb0] sm:$0xf]
        %v387 = vld [vmem:[%s272 + $0xb4] sm:$0xf]
        %v388 = vld [vmem:[%s272 + $0xb8] sm:$0xf]
        %v389 = vld [vmem:[%s272 + $0xbc] sm:$0xf]
        %v390 = vld [vmem:[%s272 + $0xc0] sm:$0xf]
        %v391 = vld [vmem:[%s272 + $0xc4] sm:$0xf]
        %v392 = vld [vmem:[%s272 + $0xc8] sm:$0xf]
        %v393 = vld [vmem:[%s272 + $0xcc] sm:$0xf]
        %v394 = vld [vmem:[%s272 + $0xd0] sm:$0xf]
        %v395 = vld [vmem:[%s272 + $0xd4] sm:$0xf]
        %v396 = vld [vmem:[%s272 + $0xd8] sm:$0xf]
        %v397 = vld [vmem:[%s272 + $0xdc] sm:$0xf]
        %v398 = vld [vmem:[%s272 + $0xe0] sm:$0xf]
        %v399 = vld [vmem:[%s272 + $0xe4] sm:$0xf]
        %v400 = vld [vmem:[%s272 + $0xe8] sm:$0xf]
        %v401 = vld [vmem:[%s272 + $0xec] sm:$0xf]
        %v402 = vld [vmem:[%s272 + $0xf0] sm:$0xf]
        %v403 = vld [vmem:[%s272 + $0xf4] sm:$0xf]
        %v404 = vld [vmem:[%s272 + $0xf8] sm:$0xf]
        %v405 = vld [vmem:[%s272 + $0xfc] sm:$0xf]
        %v470 = vunpack.c.l.b16 %v342
        %v471 = vunpack.c.l.b16 %v343
        %v472 = vunpack.c.l.b16 %v344
        %v473 = vunpack.c.l.b16 %v345
        %v474 = vunpack.c.l.b16 %v346
        %v475 = vunpack.c.l.b16 %v347
        %v476 = vunpack.c.l.b16 %v348
        %v477 = vunpack.c.l.b16 %v349
        %v478 = vunpack.c.l.b16 %v350
        %v479 = vunpack.c.l.b16 %v351
        %v480 = vunpack.c.l.b16 %v352
        %v481 = vunpack.c.l.b16 %v353
        %v482 = vunpack.c.l.b16 %v354
        %v483 = vunpack.c.l.b16 %v355
        %v484 = vunpack.c.l.b16 %v356
        %v485 = vunpack.c.l.b16 %v357
        %v486 = vunpack.c.l.b16 %v358
        %v487 = vunpack.c.l.b16 %v359
        %v488 = vunpack.c.l.b16 %v360
        %v489 = vunpack.c.l.b16 %v361
        %v490 = vunpack.c.l.b16 %v362
        %v491 = vunpack.c.l.b16 %v363
        %v492 = vunpack.c.l.b16 %v364
        %v493 = vunpack.c.l.b16 %v365
        %v494 = vunpack.c.l.b16 %v366
        %v495 = vunpack.c.l.b16 %v367
        %v496 = vunpack.c.l.b16 %v368
        %v497 = vunpack.c.l.b16 %v369
        %v498 = vunpack.c.l.b16 %v370
        %v499 = vunpack.c.l.b16 %v371
        %v500 = vunpack.c.l.b16 %v372
        %v501 = vunpack.c.l.b16 %v373
        %v502 = vunpack.c.l.b16 %v374
        %v503 = vunpack.c.l.b16 %v375
        %v504 = vunpack.c.l.b16 %v376
        %v505 = vunpack.c.l.b16 %v377
        %v506 = vunpack.c.l.b16 %v378
        %v507 = vunpack.c.l.b16 %v379
        %v508 = vunpack.c.l.b16 %v380
        %v509 = vunpack.c.l.b16 %v381
        %v510 = vunpack.c.l.b16 %v382
        %v511 = vunpack.c.l.b16 %v383
        %v512 = vunpack.c.l.b16 %v384
        %v513 = vunpack.c.l.b16 %v385
        %v514 = vunpack.c.l.b16 %v386
        %v515 = vunpack.c.l.b16 %v387
        %v516 = vunpack.c.l.b16 %v388
        %v517 = vunpack.c.l.b16 %v389
        %v518 = vunpack.c.l.b16 %v390
        %v519 = vunpack.c.l.b16 %v391
        %v520 = vunpack.c.l.b16 %v392
        %v521 = vunpack.c.l.b16 %v393
        %v522 = vunpack.c.l.b16 %v394
        %v523 = vunpack.c.l.b16 %v395
        %v524 = vunpack.c.l.b16 %v396
        %v525 = vunpack.c.l.b16 %v397
        %v526 = vunpack.c.l.b16 %v398
        %v527 = vunpack.c.l.b16 %v399
        %v528 = vunpack.c.l.b16 %v400
        %v529 = vunpack.c.l.b16 %v401
        %v530 = vunpack.c.l.b16 %v402
        %v531 = vunpack.c.l.b16 %v403
        %v532 = vunpack.c.l.b16 %v404
        %v533 = vunpack.c.l.b16 %v405
        %v534 = vpack.c.b16 %v471, %v470
        %v535 = vpack.c.b16 %v473, %v472
        %v536 = vpack.c.b16 %v475, %v474
        %v537 = vpack.c.b16 %v477, %v476
        %v538 = vpack.c.b16 %v479, %v478
        %v539 = vpack.c.b16 %v481, %v480
        %v540 = vpack.c.b16 %v483, %v482
        %v541 = vpack.c.b16 %v485, %v484
        %v542 = vpack.c.b16 %v487, %v486
        %v543 = vpack.c.b16 %v489, %v488
        %v544 = vpack.c.b16 %v491, %v490
        %v545 = vpack.c.b16 %v493, %v492
        %v546 = vpack.c.b16 %v495, %v494
        %v547 = vpack.c.b16 %v497, %v496
        %v548 = vpack.c.b16 %v499, %v498
        %v549 = vpack.c.b16 %v501, %v500
        %v550 = vpack.c.b16 %v503, %v502
        %v551 = vpack.c.b16 %v505, %v504
        %v552 = vpack.c.b16 %v507, %v506
        %v553 = vpack.c.b16 %v509, %v508
        %v554 = vpack.c.b16 %v511, %v510
        %v555 = vpack.c.b16 %v513, %v512
        %v556 = vpack.c.b16 %v515, %v514
        %v557 = vpack.c.b16 %v517, %v516
        %v558 = vpack.c.b16 %v519, %v518
        %v559 = vpack.c.b16 %v521, %v520
        %v560 = vpack.c.b16 %v523, %v522
        %v561 = vpack.c.b16 %v525, %v524
        %v562 = vpack.c.b16 %v527, %v526
        %v563 = vpack.c.b16 %v529, %v528
        %v564 = vpack.c.b16 %v531, %v530
        %v565 = vpack.c.b16 %v533, %v532
        %598 = vmatprep.subr.bf16.mxu0 0
        %599 = vmatpush1.bf16.msra.mxu0 %v534
        %600 = vmatprep.subr.bf16.mxu0 0
        %601 = vmatpush1.bf16.msra.mxu0 %v535
        %602 = vmatprep.subr.bf16.mxu0 0
        %603 = vmatpush1.bf16.msra.mxu0 %v536
        %604 = vmatprep.subr.bf16.mxu0 0
        %605 = vmatpush1.bf16.msra.mxu0 %v537
        %606 = vmatprep.subr.bf16.mxu0 0
        %607 = vmatpush1.bf16.msra.mxu0 %v538
        %608 = vmatprep.subr.bf16.mxu0 0
        %609 = vmatpush1.bf16.msra.mxu0 %v539
        %610 = vmatprep.subr.bf16.mxu0 0
        %611 = vmatpush1.bf16.msra.mxu0 %v540
        %612 = vmatprep.subr.bf16.mxu0 0
        %613 = vmatpush1.bf16.msra.mxu0 %v541
        %614 = vmatprep.subr.bf16.mxu0 0
        %615 = vmatpush1.bf16.msra.mxu0 %v542
        %616 = vmatprep.subr.bf16.mxu0 0
        %617 = vmatpush1.bf16.msra.mxu0 %v543
        %618 = vmatprep.subr.bf16.mxu0 0
        %619 = vmatpush1.bf16.msra.mxu0 %v544
        %620 = vmatprep.subr.bf16.mxu0 0
        %621 = vmatpush1.bf16.msra.mxu0 %v545
        %622 = vmatprep.subr.bf16.mxu0 0
        %623 = vmatpush1.bf16.msra.mxu0 %v546
        %624 = vmatprep.subr.bf16.mxu0 0
        %625 = vmatpush1.bf16.msra.mxu0 %v547
        %626 = vmatprep.subr.bf16.mxu0 0
        %627 = vmatpush1.bf16.msra.mxu0 %v548
        %628 = vmatprep.subr.bf16.mxu0 0
        %629 = vmatpush1.bf16.msra.mxu0 %v549
        %630 = vmatprep.mubr.bf16.mxu0 %v339
        %631 = vmatmul.mubr.bf16.gmra.mrb[0].mxu0 %v338
        %v632 = vpop.f32.mrb[0].mxu0
        %v633 = vadd.f32 0.0, %v632
        %v634 = vpop.f32.mrb[0].mxu0
        %v635 = vpop.f32.mrb[0].mxu0
        %v636 = vpop.f32.mrb[0].mxu0
        %637 = vdwg.mxu0
        %638 = vmatprep.subr.bf16.mxu0 0
        %639 = vmatpush1.bf16.msra.mxu0 %v550
        %640 = vmatprep.subr.bf16.mxu0 0
        %641 = vmatpush1.bf16.msra.mxu0 %v551
        %642 = vmatprep.subr.bf16.mxu0 0
        %643 = vmatpush1.bf16.msra.mxu0 %v552
        %644 = vmatprep.subr.bf16.mxu0 0
        %645 = vmatpush1.bf16.msra.mxu0 %v553
        %646 = vmatprep.subr.bf16.mxu0 0
        %647 = vmatpush1.bf16.msra.mxu0 %v554
        %648 = vmatprep.subr.bf16.mxu0 0
        %649 = vmatpush1.bf16.msra.mxu0 %v555
        %650 = vmatprep.subr.bf16.mxu0 0
        %651 = vmatpush1.bf16.msra.mxu0 %v556
        %652 = vmatprep.subr.bf16.mxu0 0
        %653 = vmatpush1.bf16.msra.mxu0 %v557
        %654 = vmatprep.subr.bf16.mxu0 0
        %655 = vmatpush1.bf16.msra.mxu0 %v558
        %656 = vmatprep.subr.bf16.mxu0 0
        %657 = vmatpush1.bf16.msra.mxu0 %v559
        %658 = vmatprep.subr.bf16.mxu0 0
        %659 = vmatpush1.bf16.msra.mxu0 %v560
        %660 = vmatprep.subr.bf16.mxu0 0
        %661 = vmatpush1.bf16.msra.mxu0 %v561
        %662 = vmatprep.subr.bf16.mxu0 0
        %663 = vmatpush1.bf16.msra.mxu0 %v562
        %664 = vmatprep.subr.bf16.mxu0 0
        %665 = vmatpush1.bf16.msra.mxu0 %v563
        %666 = vmatprep.subr.bf16.mxu0 0
        %667 = vmatpush1.bf16.msra.mxu0 %v564
        %668 = vmatprep.subr.bf16.mxu0 0
        %669 = vmatpush1.bf16.msra.mxu0 %v565
        %670 = vmatprep.mubr.bf16.mxu0 %v341
        %671 = vmatmul.mubr.bf16.gmra.mrb[0].mxu0 %v340
        %v672 = vpop.f32.mrb[0].mxu0
        %v673 = vadd.f32 %v633, %v672
        %v674 = vpop.f32.mrb[0].mxu0
        %v675 = vpop.f32.mrb[0].mxu0
        %v676 = vpop.f32.mrb[0].mxu0
        %677 = vdwg.mxu0
        %v678 = vadd.f32 %v315, %v673
        %679 = vst [vmem:[#allocation2] sm:$0x3] %v678
        %p680 = scmp.eq.s32.totalorder %s27, 1
        // Predicated region
        $region53: #{tpu_custom_call.1} parent=35 // pred_check
          %p681 = pneg %p680
        $region54: #{tpu_custom_call.1} parent=35 // pred_check_branch
          %683 = sbr.rel (%p681) target = $region56
        $region55: #{tpu_custom_call.1} parent=35 // pred_region
          %v684 = vld [vmem:[#allocation2] sm:$0x3]
          %v685 = vld [vmem:[%s3] sm:$0x1]
          %v687 = vlaneseq
          %v688 = vshrl.u32 %v687, 7
          %v689 = vsub.s32 0, %v688
          %v690 = vrot.slane %v685, %v689
          %v692 = vadd.f32 %v684, %v690
          %693 = vst [vmem:[#allocation9] sm:$0x3] %v692
        $region56: #{tpu_custom_call.1} parent=35 // pred_fallthru
          _
        // Predicated region
        $region57: #{tpu_custom_call.1} parent=35 // pred_check
          %p694 = pneg %p155
        $region58: #{tpu_custom_call.1} parent=35 // pred_check_branch
          %696 = sbr.rel (%p694) target = $region60
        $region59: #{tpu_custom_call.1} parent=35 // pred_region
          %s698 = ssub.s32 32, 32
          %699 = vsyncadd [#allocation5], %s698
          %s700 = smul.addr %s26, 32
          %s701 = scalar_lea.hbm %s4, %s700
          %s703 = sshll.u32 [#allocation9], 4
          %s704 = int_to_ptr.vmem [resolvable:$true] %s703
          %706 = dma.vmem_to_hbm [thread:$0]  %s704, 32, %s701, [#allocation5]
        $region60: #{tpu_custom_call.1} parent=35 // pred_fallthru
          _
        // Predicated region
        $region61: #{tpu_custom_call.1} parent=35 // pred_check
          %p707 = pneg %p155
        $region62: #{tpu_custom_call.1} parent=35 // pred_check_branch
          %709 = sbr.rel (%p707) target = $region64
        $region63: #{tpu_custom_call.1} parent=35 // pred_region
          %710 = dma.done [#allocation5], 32
        $region64: #{tpu_custom_call.1} parent=35 // pred_fallthru
          _
      $region36: #{tpu_custom_call.1} parent=5 // pred_fallthru
        _
      %p711 = scmp.le.s32.totalorder 2, %s17
      // Predicated region
      $region65: #{tpu_custom_call.1} parent=5 // pred_check
        %p712 = pneg %p711
      $region66: #{tpu_custom_call.1} parent=5 // pred_check_branch
        %714 = sbr.rel (%p712) target = $region68
      $region67: #{tpu_custom_call.1} parent=5 // pred_region
        %s715 = ssub.s32 %s17, 2
      $region68: #{tpu_custom_call.1} parent=5 // pred_fallthru
        _
    $region6: #{tpu_custom_call.1} parent=1 // loop_footer
      %s21 = sadd.s32 1, %s17
    $region7: #{tpu_custom_call.1} parent=1 // loop_footer_branch
      %16 = sbr.rel target = $region3
    $region8: #{tpu_custom_call.1} parent=1 // loop_exit
      _
    %716 = vsyncpa [#allocation4], 1
    %s717 = scalar_lea.sflag [#allocation4], 1
    %718 = vsyncpa %s717, 1
    %719 = vsyncpa [#allocation7], 1
    %s720 = scalar_lea.sflag [#allocation7], 1
    %721 = vsyncpa %s720, 1
    %722 = vsyncpa [#allocation5], 1
    %s723 = scalar_lea.sflag [#allocation5], 1
    %724 = vsyncpa %s723, 1

</llo_original>
